<compile_context>
chip_gen: v7x
topology: tpu7x:2x2x1
jax: 0.10.0
libtpu: 0.0.40
codegen_flags: <defaults>
</compile_context>

<pallas_src>
import functools

import jax
import jax.numpy as jnp
from jax.experimental import pallas as pl
from jax.experimental.pallas import tpu as pltpu


def _round_up(x, m):
    return ((x + m - 1) // m) * m


def pima_kernel(xT_ref, w1_ref, b1_ref, w2_ref, b2_ref, w3_ref, b3_ref, o_ref):
    xT = xT_ref[...]                                             # (8, TILE_B)

    # Layer 1: Linear(8 -> 12) + ReLU  (MXU matmul, N = TILE_B lane-dense)
    h1 = jnp.dot(w1_ref[...], xT, preferred_element_type=jnp.float32)
    h1 = jnp.maximum(h1 + b1_ref[...], 0.0)                      # (12, TILE_B)

    # Layer 2: Linear(12 -> 8) + ReLU
    h2 = jnp.dot(w2_ref[...], h1, preferred_element_type=jnp.float32)
    h2 = jnp.maximum(h2 + b2_ref[...], 0.0)                      # (8, TILE_B)

    # Output layer: Linear(8 -> 1) done on the VPU (elementwise mul) + a
    # feature-axis reduce -- avoids an N=1 MXU push. Sigmoid is on the EUP.
    logits = jnp.sum(h2 * w3_ref[...], axis=0, keepdims=True) + b3_ref[...]
    o_ref[...] = jax.nn.sigmoid(logits).astype(o_ref.dtype)      # (1, TILE_B)


@functools.partial(jax.jit, static_argnames=("tile_b",))
def pima_classifier(x, params, *, tile_b=512):
    """x: (B, 8) float32. Returns (B, 1) float32 sigmoid probabilities."""
    w1, b1, w2, b2, w3, b3 = (
        params["w1"], params["b1"], params["w2"],
        params["b2"], params["w3"], params["b3"],
    )
    B, F = x.shape
    assert F == 8

    # Batch lives on the lane axis -> tile must be a multiple of 128.
    tb = min(tile_b, _round_up(B, 128))
    b_pad = _round_up(B, tb)

    # Transpose + zero-pad the batch; padded columns are sliced off at the end
    # (each column is independent, so padding never affects real rows).
    xT = jnp.zeros((8, b_pad), x.dtype).at[:, :B].set(x.T)

    resident = lambda shape: pl.BlockSpec(shape, lambda i: (0, 0))

    out = pl.pallas_call(
        pima_kernel,
        out_shape=jax.ShapeDtypeStruct((1, b_pad), jnp.float32),
        grid=(b_pad // tb,),
        in_specs=[
            pl.BlockSpec((8, tb), lambda i: (0, i)),   # x tile, pipelined
            resident(w1.shape), resident(b1.shape),    # weights stay in VMEM
            resident(w2.shape), resident(b2.shape),
            resident(w3.shape), resident(b3.shape),
        ],
        out_specs=pl.BlockSpec((1, tb), lambda i: (0, i)),
        compiler_params=pltpu.CompilerParams(
            dimension_semantics=("parallel",)),
    )(xT, w1, b1, w2, b2, w3, b3)

    return out[0, :B][:, None]                                   # (B, 1)


def init_params(key):
    """PyTorch-style uniform init.

    Weights are stored as (out_features, in_features) like nn.Linear, except
    w3 which is kept as a (8, 1) column for the in-kernel VPU reduce. Biases
    are (out_features, 1) columns so they broadcast over the lane (batch) axis.
    """
    ks = jax.random.split(key, 6)

    def uniform(k, shape, fan_in):
        bound = 1.0 / jnp.sqrt(fan_in)
        return jax.random.uniform(k, shape, jnp.float32, -bound, bound)

    return {
        "w1": uniform(ks[0], (12, 8), 8.0),
        "b1": uniform(ks[1], (12, 1), 8.0),
        "w2": uniform(ks[2], (8, 12), 12.0),
        "b2": uniform(ks[3], (8, 1), 12.0),
        "w3": uniform(ks[4], (8, 1), 8.0),
        "b3": uniform(ks[5], (1, 1), 8.0),
    }


def reference_forward(x, p):
    h1 = jnp.maximum(x @ p["w1"].T + p["b1"].T, 0.0)
    h2 = jnp.maximum(h1 @ p["w2"].T + p["b2"].T, 0.0)
    return jax.nn.sigmoid(h2 @ p["w3"] + p["b3"])


if __name__ == "__main__":
    key = jax.random.PRNGKey(0)
    k_params, k_x = jax.random.split(key)

    params = init_params(k_params)
    x = jax.random.normal(k_x, (8, 8), dtype=jnp.float32)  # batch=8, features=8

    out = jax.block_until_ready(pima_classifier(x, params))
    ref = reference_forward(x, params)

    assert out.shape == (8, 1)
    assert jnp.allclose(out, ref, atol=1e-4, rtol=1e-4), float(
        jnp.max(jnp.abs(out - ref)))

    print("KERNEL_OK")
</pallas_src>

<mosaic_0001>
module attributes {stable_mosaic.version = 11 : i64} {
  func.func @pima_kernel(%arg0: i32, %arg1: memref<8x128xf32, #tpu.memory_space<vmem>>, %arg2: memref<12x8xf32, #tpu.memory_space<vmem>>, %arg3: memref<12x1xf32, #tpu.memory_space<vmem>>, %arg4: memref<8x12xf32, #tpu.memory_space<vmem>>, %arg5: memref<8x1xf32, #tpu.memory_space<vmem>>, %arg6: memref<8x1xf32, #tpu.memory_space<vmem>>, %arg7: memref<1x1xf32, #tpu.memory_space<vmem>>, %arg8: memref<1x128xf32, #tpu.memory_space<vmem>>) attributes {dimension_semantics = [#tpu.dimension_semantics<parallel>], iteration_bounds = array<i64: 1>, scalar_prefetch = 0 : i64, scratch_operands = 0 : i64, tpu.core_type = #tpu.core_type<tc>, window_params = [{transform_indices = @transform_0, window_bounds = array<i64: 8, 128>}, {pipeline_mode = #tpu.pipeline_mode<synchronous>, transform_indices = @transform_1, window_bounds = array<i64: 12, 8>}, {pipeline_mode = #tpu.pipeline_mode<synchronous>, transform_indices = @transform_2, window_bounds = array<i64: 12, 1>}, {pipeline_mode = #tpu.pipeline_mode<synchronous>, transform_indices = @transform_3, window_bounds = array<i64: 8, 12>}, {pipeline_mode = #tpu.pipeline_mode<synchronous>, transform_indices = @transform_4, window_bounds = array<i64: 8, 1>}, {pipeline_mode = #tpu.pipeline_mode<synchronous>, transform_indices = @transform_5, window_bounds = array<i64: 8, 1>}, {pipeline_mode = #tpu.pipeline_mode<synchronous>, transform_indices = @transform_6, window_bounds = array<i64: 1, 1>}, {transform_indices = @transform_7, window_bounds = array<i64: 1, 128>}]} {
    %c0 = arith.constant 0 : index
    %c0_0 = arith.constant 0 : index
    %0 = vector.load %arg1[%c0, %c0_0] : memref<8x128xf32, #tpu.memory_space<vmem>>, vector<8x128xf32>
    %c0_1 = arith.constant 0 : index
    %c0_2 = arith.constant 0 : index
    %1 = vector.load %arg2[%c0_1, %c0_2] : memref<12x8xf32, #tpu.memory_space<vmem>>, vector<12x8xf32>
    %cst = arith.constant dense<0.000000e+00> : vector<12x128xf32>
    %2 = tpu.matmul %1, %0, %cst {dimension_numbers = #tpu.dot_dimension_numbers<[1], [0], [0], [1], [0, 0, 1, 1], [], []>} : vector<12x8xf32>, vector<8x128xf32>, vector<12x128xf32> -> vector<12x128xf32>
    %c0_3 = arith.constant 0 : index
    %c0_4 = arith.constant 0 : index
    %3 = vector.load %arg3[%c0_3, %c0_4] : memref<12x1xf32, #tpu.memory_space<vmem>>, vector<12x1xf32>
    %4 = vector.broadcast %3 : vector<12x1xf32> to vector<12x128xf32>
    %5 = arith.addf %2, %4 : vector<12x128xf32>
    %cst_5 = arith.constant 0.000000e+00 : f32
    %6 = vector.broadcast %cst_5 : f32 to vector<12x128xf32>
    %7 = arith.maximumf %5, %6 : vector<12x128xf32>
    %c0_6 = arith.constant 0 : index
    %c0_7 = arith.constant 0 : index
    %8 = vector.load %arg4[%c0_6, %c0_7] : memref<8x12xf32, #tpu.memory_space<vmem>>, vector<8x12xf32>
    %cst_8 = arith.constant dense<0.000000e+00> : vector<8x128xf32>
    %9 = tpu.matmul %8, %7, %cst_8 {dimension_numbers = #tpu.dot_dimension_numbers<[1], [0], [0], [1], [0, 0, 1, 1], [], []>} : vector<8x12xf32>, vector<12x128xf32>, vector<8x128xf32> -> vector<8x128xf32>
    %c0_9 = arith.constant 0 : index
    %c0_10 = arith.constant 0 : index
    %10 = vector.load %arg5[%c0_9, %c0_10] : memref<8x1xf32, #tpu.memory_space<vmem>>, vector<8x1xf32>
    %11 = vector.broadcast %10 : vector<8x1xf32> to vector<8x128xf32>
    %12 = arith.addf %9, %11 : vector<8x128xf32>
    %cst_11 = arith.constant 0.000000e+00 : f32
    %13 = vector.broadcast %cst_11 : f32 to vector<8x128xf32>
    %14 = arith.maximumf %12, %13 : vector<8x128xf32>
    %c0_12 = arith.constant 0 : index
    %c0_13 = arith.constant 0 : index
    %15 = vector.load %arg6[%c0_12, %c0_13] : memref<8x1xf32, #tpu.memory_space<vmem>>, vector<8x1xf32>
    %16 = vector.broadcast %15 : vector<8x1xf32> to vector<8x128xf32>
    %17 = arith.mulf %14, %16 : vector<8x128xf32>
    %cst_14 = arith.constant dense<0.000000e+00> : vector<128xf32>
    %18 = vector.multi_reduction <add>, %17, %cst_14 [0] : vector<8x128xf32> to vector<128xf32>
    %19 = vector.shape_cast %18 : vector<128xf32> to vector<1x128xf32>
    %c0_15 = arith.constant 0 : index
    %c0_16 = arith.constant 0 : index
    %20 = vector.load %arg7[%c0_15, %c0_16] : memref<1x1xf32, #tpu.memory_space<vmem>>, vector<1x1xf32>
    %21 = vector.broadcast %20 : vector<1x1xf32> to vector<1x128xf32>
    %22 = arith.addf %19, %21 : vector<1x128xf32>
    %23 = arith.negf %22 : vector<1x128xf32>
    %24 = math.exp %23 : vector<1x128xf32>
    %cst_17 = arith.constant 1.000000e+00 : f32
    %25 = vector.broadcast %cst_17 : f32 to vector<1x128xf32>
    %26 = arith.addf %25, %24 : vector<1x128xf32>
    %27 = arith.divf %25, %26 : vector<1x128xf32>
    %c0_18 = arith.constant 0 : index
    %c0_19 = arith.constant 0 : index
    %28 = vector.load %arg8[%c0_18, %c0_19] : memref<1x128xf32, #tpu.memory_space<vmem>>, vector<1x128xf32>
    tpu.vector_store %arg8[%c0_18, %c0_19], %27 {strides = array<i32>} : memref<1x128xf32, #tpu.memory_space<vmem>>, vector<1x128xf32>,
    return
  }
  func.func @transform_0(%arg0: i32) -> (i32, i32) {
    %c0_i32 = arith.constant 0 : i32
    %c0_i32_0 = arith.constant 0 : i32
    return %c0_i32, %arg0 : i32, i32
  }
  func.func @transform_1(%arg0: i32) -> (i32, i32) {
    %c0_i32 = arith.constant 0 : i32
    %c0_i32_0 = arith.constant 0 : i32
    %c0_i32_1 = arith.constant 0 : i32
    return %c0_i32, %c0_i32_0 : i32, i32
  }
  func.func @transform_2(%arg0: i32) -> (i32, i32) {
    %c0_i32 = arith.constant 0 : i32
    %c0_i32_0 = arith.constant 0 : i32
    %c0_i32_1 = arith.constant 0 : i32
    return %c0_i32, %c0_i32_0 : i32, i32
  }
  func.func @transform_3(%arg0: i32) -> (i32, i32) {
    %c0_i32 = arith.constant 0 : i32
    %c0_i32_0 = arith.constant 0 : i32
    %c0_i32_1 = arith.constant 0 : i32
    return %c0_i32, %c0_i32_0 : i32, i32
  }
  func.func @transform_4(%arg0: i32) -> (i32, i32) {
    %c0_i32 = arith.constant 0 : i32
    %c0_i32_0 = arith.constant 0 : i32
    %c0_i32_1 = arith.constant 0 : i32
    return %c0_i32, %c0_i32_0 : i32, i32
  }
  func.func @transform_5(%arg0: i32) -> (i32, i32) {
    %c0_i32 = arith.constant 0 : i32
    %c0_i32_0 = arith.constant 0 : i32
    %c0_i32_1 = arith.constant 0 : i32
    return %c0_i32, %c0_i32_0 : i32, i32
  }
  func.func @transform_6(%arg0: i32) -> (i32, i32) {
    %c0_i32 = arith.constant 0 : i32
    %c0_i32_0 = arith.constant 0 : i32
    %c0_i32_1 = arith.constant 0 : i32
    return %c0_i32, %c0_i32_0 : i32, i32
  }
  func.func @transform_7(%arg0: i32) -> (i32, i32) {
    %c0_i32 = arith.constant 0 : i32
    %c0_i32_0 = arith.constant 0 : i32
    return %c0_i32, %arg0 : i32, i32
  }
}

</mosaic_0001>

<llo_original>
// kernel: pima_classifier.1
$region0: #{pima_classifier.1}
  #allocation0 [shape = 'u32[]', space=smem, size = 0x4, offset = 0x4, fixed_abs, tag = 'smem constant byte address 0x4 - core index']
  #allocation1 [shape = 'u32[144,128]{1,0:T(1,128)}', space=vmem, size = 0x12000, scoped, tag = 'internal scratch']
  #allocation2 [shape = 'f32[1,1]{1,0:T(1,128)S(1)}', space=vmem, size = 0x200, scoped, tag = 'scoped memory for pima_classifier.1']
  %s0 = inlined_call_operand.vmem [shape: f32[8,128], index: 0, kind: input, shape index: {}]
  %s1 = inlined_call_operand.vmem [shape: f32[12,8], index: 1, kind: input, shape index: {}]
  %s2 = inlined_call_operand.vmem [shape: f32[12,1], index: 2, kind: input, shape index: {}]
  %s3 = inlined_call_operand.vmem [shape: f32[8,12], index: 3, kind: input, shape index: {}]
  %s4 = inlined_call_operand.vmem [shape: f32[8,1], index: 4, kind: input, shape index: {}]
  %s5 = inlined_call_operand.vmem [shape: f32[8,1], index: 5, kind: input, shape index: {}]
  %s6 = inlined_call_operand.<no memory space> [shape: f32[1,1], index: 6, kind: input, shape index: {}]
  %s7 = inlined_call_operand.vmem [shape: f32[1,128], index: 7, kind: output, shape index: {}]
  %s8 = sld [smem:[#allocation0]]
  $region38: #{pima_classifier.1} parent=0
    _
  %s10 = ssub.s32 1, %s8
  %s11 = scalar_select 0, %s10, %s8
  %v12 = vstv %s6
  %13 = vst [vmem:[#allocation2] sm:$0x1] %v12
  // Predicated region
  $region2: #{pima_classifier.1} parent=0 // pred_check
    _
  $region3: #{pima_classifier.1} parent=0 // pred_check_branch
    %15 = sbr.rel (0) target = $region5
  $region4: #{pima_classifier.1} parent=0 // pred_region
    _
  $region5: #{pima_classifier.1} parent=0 // pred_fallthru
    _
  // Predicated region
  $region6: #{pima_classifier.1} parent=0 // pred_check
    _
  $region7: #{pima_classifier.1} parent=0 // pred_check_branch
    %17 = sbr.rel (0) target = $region9
  $region8: #{pima_classifier.1} parent=0 // pred_region
    _
  $region9: #{pima_classifier.1} parent=0 // pred_fallthru
    _
  // Predicated region
  $region10: #{pima_classifier.1} parent=0 // pred_check
    _
  $region11: #{pima_classifier.1} parent=0 // pred_check_branch
    %19 = sbr.rel (0) target = $region13
  $region12: #{pima_classifier.1} parent=0 // pred_region
    _
  $region13: #{pima_classifier.1} parent=0 // pred_fallthru
    _
  // Predicated region
  $region14: #{pima_classifier.1} parent=0 // pred_check
    _
  $region15: #{pima_classifier.1} parent=0 // pred_check_branch
    %21 = sbr.rel (0) target = $region17
  $region16: #{pima_classifier.1} parent=0 // pred_region
    _
  $region17: #{pima_classifier.1} parent=0 // pred_fallthru
    _
  // Predicated region
  $region18: #{pima_classifier.1} parent=0 // pred_check
    _
  $region19: #{pima_classifier.1} parent=0 // pred_check_branch
    %23 = sbr.rel (0) target = $region21
  $region20: #{pima_classifier.1} parent=0 // pred_region
    _
  $region21: #{pima_classifier.1} parent=0 // pred_fallthru
    _
  // Predicated region
  $region22: #{pima_classifier.1} parent=0 // pred_check
    _
  $region23: #{pima_classifier.1} parent=0 // pred_check_branch
    %25 = sbr.rel (0) target = $region25
  $region24: #{pima_classifier.1} parent=0 // pred_region
    _
  $region25: #{pima_classifier.1} parent=0 // pred_fallthru
    _
  // Predicated region
  $region26: #{pima_classifier.1} parent=0 // pred_check
    _
  $region27: #{pima_classifier.1} parent=0 // pred_check_branch
    %27 = sbr.rel (0) target = $region29
  $region28: #{pima_classifier.1} parent=0 // pred_region
    _
  $region29: #{pima_classifier.1} parent=0 // pred_fallthru
    _
  %v28 = vld [vmem:[%s0] sm:$0xff]
  %v29 = vld [vmem:[%s1] sm:$0xff]
  %v30 = vld [vmem:[%s1 + $0x8] sm:$0xf]
  %v31 = vld [vmem:[%s2] sm:$0xff]
  %v32 = vld [vmem:[%s2 + $0x8] sm:$0xf]
  %34 = vset.pattern.permute.xlu0 0
  %35 = vperm.xlu0 %34, %v31
  %v36 = vpop.permute.xlu0 %35
  %39 = vset.pattern.permute.xlu0 0
  %40 = vperm.xlu0 %39, %v32
  %v41 = vpop.permute.xlu0 %40
  %vm43 = vcmask 64512
  %v45 = vsel %vm43, %v29, 0
  %v48 = vsel %vm43, %v30, 0
  %50 = vmatprep.subr.mxu0 0.0
  %51 = vmatpush1.msra.mxu0 %v28
  %52 = vmatprep.subr.mxu0 0.0
  %53 = vmatpush1.msra.mxu0 0.0
  %54 = vmatprep.subr.mxu0 0.0
  %55 = vmatpush1.msra.mxu0 0.0
  %56 = vmatprep.subr.mxu0 0.0
  %57 = vmatpush1.msra.mxu0 0.0
  %58 = vmatprep.subr.mxu0 0.0
  %59 = vmatpush1.msra.mxu0 0.0
  %60 = vmatprep.subr.mxu0 0.0
  %61 = vmatpush1.msra.mxu0 0.0
  %62 = vmatprep.subr.mxu0 0.0
  %63 = vmatpush1.msra.mxu0 0.0
  %64 = vmatprep.subr.mxu0 0.0
  %65 = vmatpush1.msra.mxu0 0.0
  %66 = vmatprep.subr.mxu0 0.0
  %67 = vmatpush1.msra.mxu0 0.0
  %68 = vmatprep.subr.mxu0 0.0
  %69 = vmatpush1.msra.mxu0 0.0
  %70 = vmatprep.subr.mxu0 0.0
  %71 = vmatpush1.msra.mxu0 0.0
  %72 = vmatprep.subr.mxu0 0.0
  %73 = vmatpush1.msra.mxu0 0.0
  %74 = vmatprep.subr.mxu0 0.0
  %75 = vmatpush1.msra.mxu0 0.0
  %76 = vmatprep.subr.mxu0 0.0
  %77 = vmatpush1.msra.mxu0 0.0
  %78 = vmatprep.subr.mxu0 0.0
  %79 = vmatpush1.msra.mxu0 0.0
  %80 = vmatprep.subr.mxu0 0.0
  %81 = vmatpush1.msra.mxu0 0.0
  %82 = vmatprep.subr.mxu0 0.0
  %83 = vmatpush1.msra.mxu0 0.0
  %84 = vmatprep.subr.mxu0 0.0
  %85 = vmatpush1.msra.mxu0 0.0
  %86 = vmatprep.subr.mxu0 0.0
  %87 = vmatpush1.msra.mxu0 0.0
  %88 = vmatprep.subr.mxu0 0.0
  %89 = vmatpush1.msra.mxu0 0.0
  %90 = vmatprep.subr.mxu0 0.0
  %91 = vmatpush1.msra.mxu0 0.0
  %92 = vmatprep.subr.mxu0 0.0
  %93 = vmatpush1.msra.mxu0 0.0
  %94 = vmatprep.subr.mxu0 0.0
  %95 = vmatpush1.msra.mxu0 0.0
  %96 = vmatprep.subr.mxu0 0.0
  %97 = vmatpush1.msra.mxu0 0.0
  %98 = vmatprep.subr.mxu0 0.0
  %99 = vmatpush1.msra.mxu0 0.0
  %100 = vmatprep.subr.mxu0 0.0
  %101 = vmatpush1.msra.mxu0 0.0
  %102 = vmatprep.subr.mxu0 0.0
  %103 = vmatpush1.msra.mxu0 0.0
  %104 = vmatprep.subr.mxu0 0.0
  %105 = vmatpush1.msra.mxu0 0.0
  %106 = vmatprep.subr.mxu0 0.0
  %107 = vmatpush1.msra.mxu0 0.0
  %108 = vmatprep.subr.mxu0 0.0
  %109 = vmatpush1.msra.mxu0 0.0
  %110 = vmatprep.subr.mxu0 0.0
  %111 = vmatpush1.msra.mxu0 0.0
  %112 = vmatprep.subr.mxu0 0.0
  %113 = vmatpush1.msra.mxu0 0.0
  %114 = vmatprep.mubr.f32.mxu0 0.0
  %115 = vmatmul.mubr.f32.gmra.mrb[0].mxu0 %v45
  %v116 = vpop.f32.mrb[0].mxu0
  %v117 = vadd.f32 %v36, %v116
  %v118 = vpop.f32.mrb[0].mxu0
  %119 = vmatprep.mubr.f32.mxu0 0.0
  %120 = vmatmul.mubr.f32.gmra.mrb[0].mxu0 %v48
  %v121 = vpop.f32.mrb[0].mxu0
  %v122 = vadd.f32 %v41, %v121
  %v123 = vpop.f32.mrb[0].mxu0
  %124 = vdwg.mxu0
  %v125 = vmax.f32 %v117, 0.0
  %v126 = vmax.f32 %v122, 0.0
  %v127 = vld [vmem:[%s3] sm:$0xff]
  %v128 = vld [vmem:[%s4] sm:$0xff]
  %130 = vset.pattern.permute.xlu0 0
  %131 = vperm.xlu0 %130, %v128
  %v132 = vpop.permute.xlu0 %131
  %vm134 = vcmask 97280
  %v136 = vsel %vm134, %v127, 0
  %vm138 = vcmask 1043456
  %v140 = vsel %vm138, %v126, 0
  %142 = vmatprep.subr.mxu0 0.0
  %143 = vmatpush1.msra.mxu0 %v125
  %144 = vmatprep.subr.mxu0 0.0
  %145 = vmatpush1.msra.mxu0 %v140
  %146 = vmatprep.subr.mxu0 0.0
  %147 = vmatpush1.msra.mxu0 0.0
  %148 = vmatprep.subr.mxu0 0.0
  %149 = vmatpush1.msra.mxu0 0.0
  %150 = vmatprep.subr.mxu0 0.0
  %151 = vmatpush1.msra.mxu0 0.0
  %152 = vmatprep.subr.mxu0 0.0
  %153 = vmatpush1.msra.mxu0 0.0
  %154 = vmatprep.subr.mxu0 0.0
  %155 = vmatpush1.msra.mxu0 0.0
  %156 = vmatprep.subr.mxu0 0.0
  %157 = vmatpush1.msra.mxu0 0.0
  %158 = vmatprep.subr.mxu0 0.0
  %159 = vmatpush1.msra.mxu0 0.0
  %160 = vmatprep.subr.mxu0 0.0
  %161 = vmatpush1.msra.mxu0 0.0
  %162 = vmatprep.subr.mxu0 0.0
  %163 = vmatpush1.msra.mxu0 0.0
  %164 = vmatprep.subr.mxu0 0.0
  %165 = vmatpush1.msra.mxu0 0.0
  %166 = vmatprep.subr.mxu0 0.0
  %167 = vmatpush1.msra.mxu0 0.0
  %168 = vmatprep.subr.mxu0 0.0
  %169 = vmatpush1.msra.mxu0 0.0
  %170 = vmatprep.subr.mxu0 0.0
  %171 = vmatpush1.msra.mxu0 0.0
  %172 = vmatprep.subr.mxu0 0.0
  %173 = vmatpush1.msra.mxu0 0.0
  %174 = vmatprep.subr.mxu0 0.0
  %175 = vmatpush1.msra.mxu0 0.0
  %176 = vmatprep.subr.mxu0 0.0
  %177 = vmatpush1.msra.mxu0 0.0
  %178 = vmatprep.subr.mxu0 0.0
  %179 = vmatpush1.msra.mxu0 0.0
  %180 = vmatprep.subr.mxu0 0.0
  %181 = vmatpush1.msra.mxu0 0.0
  %182 = vmatprep.subr.mxu0 0.0
  %183 = vmatpush1.msra.mxu0 0.0
  %184 = vmatprep.subr.mxu0 0.0
  %185 = vmatpush1.msra.mxu0 0.0
  %186 = vmatprep.subr.mxu0 0.0
  %187 = vmatpush1.msra.mxu0 0.0
  %188 = vmatprep.subr.mxu0 0.0
  %189 = vmatpush1.msra.mxu0 0.0
  %190 = vmatprep.subr.mxu0 0.0
  %191 = vmatpush1.msra.mxu0 0.0
  %192 = vmatprep.subr.mxu0 0.0
  %193 = vmatpush1.msra.mxu0 0.0
  %194 = vmatprep.subr.mxu0 0.0
  %195 = vmatpush1.msra.mxu0 0.0
  %196 = vmatprep.subr.mxu0 0.0
  %197 = vmatpush1.msra.mxu0 0.0
  %198 = vmatprep.subr.mxu0 0.0
  %199 = vmatpush1.msra.mxu0 0.0
  %200 = vmatprep.subr.mxu0 0.0
  %201 = vmatpush1.msra.mxu0 0.0
  %202 = vmatprep.subr.mxu0 0.0
  %203 = vmatpush1.msra.mxu0 0.0
  %204 = vmatprep.subr.mxu0 0.0
  %205 = vmatpush1.msra.mxu0 0.0
  %206 = vmatprep.mubr.f32.mxu0 0.0
  %207 = vmatmul.mubr.f32.gmra.mrb[0].mxu0 %v136
  %v208 = vpop.f32.mrb[0].mxu0
  %v209 = vadd.f32 %v132, %v208
  %v210 = vpop.f32.mrb[0].mxu0
  %211 = vdwg.mxu0
  %v212 = vmax.f32 %v209, 0.0
  %v213 = vld [vmem:[%s5] sm:$0xff]
  %215 = vset.pattern.permute.xlu0 0
  %216 = vperm.xlu0 %215, %v213
  %v217 = vpop.permute.xlu0 %216
  %v219 = vmul.f32 %v212, %v217
  %v220 = vrot.slane %v219, 4
  %v221 = vadd.f32 %v219, %v220
  %v222 = vrot.slane %v221, 2
  %v223 = vadd.f32 %v221, %v222
  %v224 = vrot.slane %v223, 1
  %v225 = vadd.f32 %v223, %v224
  %v226 = vld [vmem:[#allocation2] sm:$0x1]
  %228 = vset.pattern.permute.xlu0 0
  %229 = vperm.xlu0 %228, %v226
  %v230 = vpop.permute.xlu0 %229
  %v232 = vlaneseq
  %v233 = vshrl.u32 %v232, 7
  %v234 = vsub.s32 0, %v233
  %v235 = vrot.slane %v230, %v234
  %v236 = vadd.f32 %v225, %v235
  %v237 = vxor.u32 %v236, 2147483648
  %v238 = vmul.f32 %v237, 1.442695
  %v239 = vpow.pop %v238
  %v240 = vadd.f32 %v239, 1.0
  %v241 = vrcp.pop %v240
  %v242 = vmul.f32 1.0, %v241
  %243 = vst [vmem:[%s7] sm:$0x1] %v242
  // Predicated region
  $region30: #{pima_classifier.1} parent=0 // pred_check
    _
  $region31: #{pima_classifier.1} parent=0 // pred_check_branch
    %245 = sbr.rel (0) target = $region33
  $region32: #{pima_classifier.1} parent=0 // pred_region
    _
  $region33: #{pima_classifier.1} parent=0 // pred_fallthru
    _
  // Predicated region
  $region34: #{pima_classifier.1} parent=0 // pred_check
    _
  $region35: #{pima_classifier.1} parent=0 // pred_check_branch
    %247 = sbr.rel (0) target = $region37
  $region36: #{pima_classifier.1} parent=0 // pred_region
    _
  $region37: #{pima_classifier.1} parent=0 // pred_fallthru
    _

</llo_original>
